<compile_context>
chip_gen: v7x
topology: tpu7x:2x2x1
jax: 0.10.0
libtpu: 0.0.40
codegen_flags: <defaults>
</compile_context>

<pallas_src>
import jax
import jax.numpy as jnp
from jax import lax
from jax.experimental import pallas as pl
from jax.experimental.pallas import tpu as pltpu


def _round_up(x: int, m: int) -> int:
    return ((x + m - 1) // m) * m


def _pad2d(a, rows, cols):
    pr, pc = rows - a.shape[0], cols - a.shape[1]
    if pr or pc:
        a = jnp.pad(a, ((0, pr), (0, pc)))
    return a


def _cap_tile(extent: int, cap: int, mult: int) -> int:
    """Tile = min(cap, extent) rounded so it is a positive multiple of `mult`."""
    cap = max(mult, (cap // mult) * mult)
    return min(cap, _round_up(extent, mult))


def _chip_defaults():
    """Per-generation tile caps + VMEM budget. Conservative (v7x-sized) fallback."""
    vmem = 64 << 20
    try:
        info = pltpu.get_tpu_info()
        vmem = int(getattr(info, "vmem_capacity_bytes", vmem))
    except Exception:
        pass
    if vmem >= (96 << 20):
        # v5e / v6e: 128 MiB VMEM -> big tiles, fewer grid steps, fewer acc RMW passes.
        return dict(tm_max=1024, tn_max=1024, tk_max=1024,
                    vmem_limit=100 << 20, split_m_for_megacore=False)
    # v7x-class: 64 MiB VMEM per TC -> smaller budget, but 2 TCs -> ensure >=2 M tiles.
    return dict(tm_max=512, tn_max=512, tk_max=1024,
                vmem_limit=48 << 20, split_m_for_megacore=True)


def _rosa_linear_kernel(x_ref, w_ref, b_ref, a_ref, bmat_ref, o_ref, acc_ref, ax_ref):
    # grid = (M tiles, N tiles, K tiles); K is the reduction axis (innermost).
    j = pl.program_id(1)
    k = pl.program_id(2)
    nk = pl.num_programs(2)
    tk = x_ref.shape[1]

    x = x_ref[...]                                   # (tm, tk) bf16

    # Base linear: x @ W  (W pre-transposed to (K, N) and pre-cast to bf16 in the
    # wrapper; f32 accumulation on the MXU). No in-kernel transposes.
    base = jnp.dot(x, w_ref[...], preferred_element_type=jnp.float32)

    # Bias folded into the accumulator init (saves a (tm, tn) VPU add + zero store).
    @pl.when(k == 0)
    def _():
        acc_ref[...] = base + b_ref[...]             # (1, tn) broadcasts over tm

    @pl.when(k != 0)
    def _():
        acc_ref[...] += base

    # Hoisted LoRA A-projection: ax = x_bf16 @ A^T, accumulated over K only on the
    # j == 0 sweep of this M tile, then reused for every N tile of the same M tile.
    # (Correct only because axis j is sequential — dimension_semantics keeps it
    # "arbitrary"; do NOT mark j parallel.)  A is fully VMEM-resident (constant
    # index_map -> fetched once), sliced here per K step.
    @pl.when(j == 0)
    def _():
        k0 = pl.multiple_of(k * tk, 128)
        a_blk = a_ref[pl.ds(k0, tk), :]              # (tk, r_pad) bf16
        pa = jnp.dot(x, a_blk, preferred_element_type=jnp.float32)

        @pl.when(k == 0)
        def _():
            ax_ref[...] = pa

        @pl.when(k != 0)
        def _():
            ax_ref[...] += pa

    # Finalize this (M, N) output tile on the last K step:
    #   out = (base + bias) + ax.bf16 @ (scaling * B)^T
    @pl.when(k == nk - 1)
    def _():
        ax_bf = ax_ref[...].astype(jnp.bfloat16)     # rosa_A output dtype (bf16)
        lora = jnp.dot(ax_bf, bmat_ref[...], preferred_element_type=jnp.float32)
        o_ref[...] = (acc_ref[...] + lora).astype(o_ref.dtype)


def rosa_linear_forward(x, base_w, base_b, rosa_a_w, rosa_b_w, scaling,
                        *, tm_max=None, tn_max=None, tk_max=None,
                        vmem_limit_bytes=None):
    """x: (batch, seq, in_features) fp32 -> (batch, seq, out_features) fp32."""
    batch, seq, in_features = x.shape
    out_features = base_w.shape[0]
    r = rosa_a_w.shape[0]
    M = batch * seq

    cfg = _chip_defaults()
    tm_max = cfg["tm_max"] if tm_max is None else tm_max
    tn_max = cfg["tn_max"] if tn_max is None else tn_max
    tk_max = cfg["tk_max"] if tk_max is None else tk_max
    vmem_limit_bytes = cfg["vmem_limit"] if vmem_limit_bytes is None else vmem_limit_bytes

    # Tile sizes: lane-dense (128-multiples) on last dims, 8-granular on M.
    tm = _cap_tile(M, tm_max, 8)
    tn = _cap_tile(out_features, tn_max, 128)
    tk = _cap_tile(in_features, tk_max, 128)

    # v7x megacore occupancy: make sure the "parallel" M axis has >= 2 tiles so the
    # second TensorCore isn't idle for small-M (decode-like) shapes.
    if cfg["split_m_for_megacore"] and M > 8 and _round_up(M, tm) // tm < 2:
        tm = max(8, _round_up((M + 1) // 2, 8))

    M_pad = _round_up(M, tm)
    N_pad = _round_up(out_features, tn)
    K_pad = _round_up(in_features, tk)
    r_pad = _round_up(r, 128)            # pad tiny LoRA rank for the MXU contraction

    # Explicit precision decision: base GEMM operands in bf16 (f32 accumulation).
    # One bf16 x serves both the base GEMM and the LoRA path (x.to(rosa_A dtype)).
    x2d = _pad2d(x.reshape(M, in_features).astype(jnp.bfloat16), M_pad, K_pad)
    w_t = _pad2d(base_w.T.astype(jnp.bfloat16), K_pad, N_pad)          # (K, N)
    bias_p = _pad2d(base_b.reshape(1, out_features).astype(jnp.float32), 1, N_pad)
    a_t = _pad2d(rosa_a_w.astype(jnp.bfloat16).T, K_pad, r_pad)        # (K, r)
    # Fold `scaling` into rosa_B once (removes a per-tile VPU multiply).
    b_scaled = (rosa_b_w.astype(jnp.float32) * jnp.float32(scaling)).astype(jnp.bfloat16)
    b_t = _pad2d(b_scaled.T, r_pad, N_pad)                             # (r, N)

    n_m_tiles = M_pad // tm
    n_n_tiles = N_pad // tn
    grid = (n_m_tiles, n_n_tiles, K_pad // tk)

    flops = (2 * M_pad * N_pad * K_pad           # base GEMM
             + 2 * M_pad * r_pad * K_pad         # LoRA A projection (once per M tile)
             + 2 * M_pad * N_pad * r_pad)        # LoRA B projection
    # Actual streamed bytes: x re-streamed per N tile; W/B/bias per M tile; A once.
    bytes_accessed = (x2d.size * 2 * n_n_tiles
                      + w_t.size * 2 * n_m_tiles
                      + a_t.size * 2
                      + b_t.size * 2 * n_m_tiles
                      + bias_p.size * 4 * n_m_tiles
                      + M_pad * N_pad * 4)

    out_pad = pl.pallas_call(
        _rosa_linear_kernel,
        out_shape=jax.ShapeDtypeStruct((M_pad, N_pad), jnp.float32),
        grid_spec=pltpu.PrefetchScalarGridSpec(
            num_scalar_prefetch=0,
            grid=grid,
            in_specs=[
                pl.BlockSpec((tm, tk), lambda i, j, k: (i, k)),          # x (bf16)
                pl.BlockSpec((tk, tn), lambda i, j, k: (k, j)),          # W^T (K, N)
                pl.BlockSpec((1, tn), lambda i, j, k: (0, j)),           # bias
                pl.BlockSpec((K_pad, r_pad), lambda i, j, k: (0, 0)),    # A^T resident
                pl.BlockSpec((r_pad, tn), lambda i, j, k: (0, j)),       # scaling*B^T
            ],
            out_specs=pl.BlockSpec((tm, tn), lambda i, j, k: (i, j)),    # fixed over K
            scratch_shapes=[
                pltpu.VMEM((tm, tn), jnp.float32),      # base+bias accumulator
                pltpu.VMEM((tm, r_pad), jnp.float32),   # hoisted A-projection
            ],
        ),
        compiler_params=pltpu.CompilerParams(
            # M is safe to shard across TensorCores. j MUST stay "arbitrary": the ax
            # scratch is filled on the j==0 pass and reused by later j. K = reduction.
            dimension_semantics=("parallel", "arbitrary", "arbitrary"),
            vmem_limit_bytes=vmem_limit_bytes,
        ),
        cost_estimate=pl.CostEstimate(
            flops=flops, transcendentals=0, bytes_accessed=bytes_accessed),
    )(x2d, w_t, bias_p, a_t, b_t)

    return out_pad[:M, :out_features].reshape(batch, seq, out_features)


def rosa_linear_reference(x, base_w, base_b, rosa_a_w, rosa_b_w, scaling):
    base = jnp.einsum("bsk,nk->bsn", x, base_w) + base_b
    x_bf = x.astype(jnp.bfloat16)
    ax = jnp.einsum("bsk,rk->bsr", x_bf, rosa_a_w).astype(jnp.bfloat16)
    lora = jnp.einsum("bsr,nr->bsn", ax, rosa_b_w).astype(jnp.bfloat16)
    lora = lora * jnp.bfloat16(scaling)
    return (base + lora.astype(jnp.float32)).astype(x.dtype)


if __name__ == "__main__":
    # Small shapes chosen so every structural feature is exercised after padding:
    # M tiling + padding (M=18 -> 24), N tiling + padding (200 -> 256),
    # K reduction over 2 tiles (192 -> 256), r padded (8 -> 128).
    batch, seq = 2, 9
    in_features, out_features = 192, 200
    r, lora_alpha = 8, 16
    scaling = lora_alpha / r   # use_rslora=False, r > 0

    key = jax.random.PRNGKey(0)
    k_x, k_w, k_b, k_a, k_bm = jax.random.split(key, 5)

    x = jax.random.normal(k_x, (batch, seq, in_features), dtype=jnp.float32)
    base_w = jax.random.normal(k_w, (out_features, in_features), dtype=jnp.float32) * 0.05
    base_b = jax.random.normal(k_b, (out_features,), dtype=jnp.float32) * 0.01
    # rosa_dtype='bf16' adapters. (Real init zeroes rosa_B; non-zero here so the
    # LoRA path is actually exercised — forward semantics are unchanged.)
    rosa_a_w = (jax.random.normal(k_a, (r, in_features), dtype=jnp.float32) * 0.1
                ).astype(jnp.bfloat16)
    rosa_b_w = (jax.random.normal(k_bm, (out_features, r), dtype=jnp.float32) * 0.1
                ).astype(jnp.bfloat16)

    # Small tile caps for the test so the grid is genuinely multi-tile: grid = (3, 2, 2).
    out = rosa_linear_forward(x, base_w, base_b, rosa_a_w, rosa_b_w, scaling,
                              tm_max=8, tn_max=128, tk_max=128)
    out = jax.block_until_ready(out)

    ref = rosa_linear_reference(x, base_w, base_b, rosa_a_w, rosa_b_w, scaling)
    assert out.shape == (batch, seq, out_features)
    assert out.dtype == jnp.float32
    # Base GEMM runs with bf16 operands + f32 accumulation (explicit choice); the
    # fp32 reference therefore matches to ~1e-3, well inside this tolerance.
    assert jnp.allclose(out, ref, atol=2e-2, rtol=2e-2), "mismatch vs reference"

    # TODO(synk): sparse SpA path (d>0, CSR spmm / sp_add), lora_dropout>0, and the
    # optional v7x fp8 weight-only-quant path are not implemented; this kernel covers
    # the dense r>0 / no-SpA forward branch.
    print("KERNEL_OK")
</pallas_src>

<mosaic_0001>
module attributes {stable_mosaic.version = 11 : i64} {
  func.func @_rosa_linear_kernel(%arg0: i32, %arg1: i32, %arg2: i32, %arg3: memref<8x128xbf16, #tpu.memory_space<vmem>>, %arg4: memref<128x128xbf16, #tpu.memory_space<vmem>>, %arg5: memref<1x128xf32, #tpu.memory_space<vmem>>, %arg6: memref<256x128xbf16, #tpu.memory_space<vmem>>, %arg7: memref<128x128xbf16, #tpu.memory_space<vmem>>, %arg8: memref<8x128xf32, #tpu.memory_space<vmem>>, %arg9: memref<8x128xf32, #tpu.memory_space<vmem>>, %arg10: memref<8x128xf32, #tpu.memory_space<vmem>>) attributes {dimension_semantics = [#tpu.dimension_semantics<parallel>, #tpu.dimension_semantics<arbitrary>, #tpu.dimension_semantics<arbitrary>], iteration_bounds = array<i64: 3, 2, 2>, scalar_prefetch = 0 : i64, scratch_operands = 2 : i64, tpu.core_type = #tpu.core_type<tc>, window_params = [{transform_indices = @transform_0, window_bounds = array<i64: 8, 128>}, {transform_indices = @transform_1, window_bounds = array<i64: 128, 128>}, {transform_indices = @transform_2, window_bounds = array<i64: 1, 128>}, {pipeline_mode = #tpu.pipeline_mode<synchronous>, transform_indices = @transform_3, window_bounds = array<i64: 256, 128>}, {transform_indices = @transform_4, window_bounds = array<i64: 128, 128>}, {transform_indices = @transform_5, window_bounds = array<i64: 8, 128>}]} {
    %c0 = arith.constant 0 : index
    %c0_0 = arith.constant 0 : index
    %0 = vector.load %arg3[%c0, %c0_0] : memref<8x128xbf16, #tpu.memory_space<vmem>>, vector<8x128xbf16>
    %c0_1 = arith.constant 0 : index
    %c0_2 = arith.constant 0 : index
    %1 = vector.load %arg4[%c0_1, %c0_2] : memref<128x128xbf16, #tpu.memory_space<vmem>>, vector<128x128xbf16>
    %cst = arith.constant dense<0.000000e+00> : vector<8x128xf32>
    %2 = tpu.matmul %0, %1, %cst {dimension_numbers = #tpu.dot_dimension_numbers<[1], [0], [0], [1], [0, 0, 1, 1], [], []>} : vector<8x128xbf16>, vector<128x128xbf16>, vector<8x128xf32> -> vector<8x128xf32>
    %c0_i32 = arith.constant 0 : i32
    %3 = arith.cmpi eq, %arg2, %c0_i32 : i32
    %4 = arith.extui %3 : i1 to i32
    %c0_i32_3 = arith.constant 0 : i32
    %5 = arith.cmpi ne, %4, %c0_i32_3 : i32
    scf.if %5 {
      %c0_9 = arith.constant 0 : index
      %c0_10 = arith.constant 0 : index
      %15 = vector.load %arg5[%c0_9, %c0_10] : memref<1x128xf32, #tpu.memory_space<vmem>>, vector<1x128xf32>
      %16 = vector.broadcast %15 : vector<1x128xf32> to vector<8x128xf32>
      %17 = arith.addf %2, %16 : vector<8x128xf32>
      %c0_11 = arith.constant 0 : index
      %c0_12 = arith.constant 0 : index
      %18 = vector.load %arg9[%c0_11, %c0_12] : memref<8x128xf32, #tpu.memory_space<vmem>>, vector<8x128xf32>
      tpu.vector_store %arg9[%c0_11, %c0_12], %17 {strides = array<i32>} : memref<8x128xf32, #tpu.memory_space<vmem>>, vector<8x128xf32>,
    } else {
    }
    %c0_i32_4 = arith.constant 0 : i32
    %6 = arith.cmpi ne, %arg2, %c0_i32_4 : i32
    %7 = arith.extui %6 : i1 to i32
    %c0_i32_5 = arith.constant 0 : i32
    %8 = arith.cmpi ne, %7, %c0_i32_5 : i32
    scf.if %8 {
      %c0_9 = arith.constant 0 : index
      %c0_10 = arith.constant 0 : index
      %15 = vector.load %arg9[%c0_9, %c0_10] : memref<8x128xf32, #tpu.memory_space<vmem>>, vector<8x128xf32>
      %16 = arith.addf %15, %2 : vector<8x128xf32>
      %c0_11 = arith.constant 0 : index
      %c0_12 = arith.constant 0 : index
      %17 = vector.load %arg9[%c0_11, %c0_12] : memref<8x128xf32, #tpu.memory_space<vmem>>, vector<8x128xf32>
      tpu.vector_store %arg9[%c0_11, %c0_12], %16 {strides = array<i32>} : memref<8x128xf32, #tpu.memory_space<vmem>>, vector<8x128xf32>,
    } else {
    }
    %c0_i32_6 = arith.constant 0 : i32
    %9 = arith.cmpi eq, %arg1, %c0_i32_6 : i32
    %10 = arith.extui %9 : i1 to i32
    %c0_i32_7 = arith.constant 0 : i32
    %11 = arith.cmpi ne, %10, %c0_i32_7 : i32
    scf.if %11 {
      %c128_i32 = arith.constant 128 : i32
      %15 = arith.muli %arg2, %c128_i32 : i32
      %16 = tpu.assume_multiple %15, 128 : i32
      %17 = arith.index_cast %16 : i32 to index
      %c0_9 = arith.constant 0 : index
      %18 = vector.load %arg6[%17, %c0_9] : memref<256x128xbf16, #tpu.memory_space<vmem>>, vector<128x128xbf16>
      %cst_10 = arith.constant dense<0.000000e+00> : vector<8x128xf32>
      %19 = tpu.matmul %0, %18, %cst_10 {dimension_numbers = #tpu.dot_dimension_numbers<[1], [0], [0], [1], [0, 0, 1, 1], [], []>} : vector<8x128xbf16>, vector<128x128xbf16>, vector<8x128xf32> -> vector<8x128xf32>
      %c0_i32_11 = arith.constant 0 : i32
      %20 = arith.cmpi eq, %arg2, %c0_i32_11 : i32
      %21 = arith.extui %20 : i1 to i32
      %c0_i32_12 = arith.constant 0 : i32
      %22 = arith.cmpi ne, %21, %c0_i32_12 : i32
      scf.if %22 {
        %c0_15 = arith.constant 0 : index
        %c0_16 = arith.constant 0 : index
        %26 = vector.load %arg10[%c0_15, %c0_16] : memref<8x128xf32, #tpu.memory_space<vmem>>, vector<8x128xf32>
        tpu.vector_store %arg10[%c0_15, %c0_16], %19 {strides = array<i32>} : memref<8x128xf32, #tpu.memory_space<vmem>>, vector<8x128xf32>,
      } else {
      }
      %c0_i32_13 = arith.constant 0 : i32
      %23 = arith.cmpi ne, %arg2, %c0_i32_13 : i32
      %24 = arith.extui %23 : i1 to i32
      %c0_i32_14 = arith.constant 0 : i32
      %25 = arith.cmpi ne, %24, %c0_i32_14 : i32
      scf.if %25 {
        %c0_15 = arith.constant 0 : index
        %c0_16 = arith.constant 0 : index
        %26 = vector.load %arg10[%c0_15, %c0_16] : memref<8x128xf32, #tpu.memory_space<vmem>>, vector<8x128xf32>
        %27 = arith.addf %26, %19 : vector<8x128xf32>
        %c0_17 = arith.constant 0 : index
        %c0_18 = arith.constant 0 : index
        %28 = vector.load %arg10[%c0_17, %c0_18] : memref<8x128xf32, #tpu.memory_space<vmem>>, vector<8x128xf32>
        tpu.vector_store %arg10[%c0_17, %c0_18], %27 {strides = array<i32>} : memref<8x128xf32, #tpu.memory_space<vmem>>, vector<8x128xf32>,
      } else {
      }
    } else {
    }
    %c1_i32 = arith.constant 1 : i32
    %12 = arith.cmpi eq, %arg2, %c1_i32 : i32
    %13 = arith.extui %12 : i1 to i32
    %c0_i32_8 = arith.constant 0 : i32
    %14 = arith.cmpi ne, %13, %c0_i32_8 : i32
    scf.if %14 {
      %c0_9 = arith.constant 0 : index
      %c0_10 = arith.constant 0 : index
      %15 = vector.load %arg10[%c0_9, %c0_10] : memref<8x128xf32, #tpu.memory_space<vmem>>, vector<8x128xf32>
      %16 = arith.truncf %15 : vector<8x128xf32> to vector<8x128xbf16>
      %c0_11 = arith.constant 0 : index
      %c0_12 = arith.constant 0 : index
      %17 = vector.load %arg7[%c0_11, %c0_12] : memref<128x128xbf16, #tpu.memory_space<vmem>>, vector<128x128xbf16>
      %cst_13 = arith.constant dense<0.000000e+00> : vector<8x128xf32>
      %18 = tpu.matmul %16, %17, %cst_13 {dimension_numbers = #tpu.dot_dimension_numbers<[1], [0], [0], [1], [0, 0, 1, 1], [], []>} : vector<8x128xbf16>, vector<128x128xbf16>, vector<8x128xf32> -> vector<8x128xf32>
      %c0_14 = arith.constant 0 : index
      %c0_15 = arith.constant 0 : index
      %19 = vector.load %arg9[%c0_14, %c0_15] : memref<8x128xf32, #tpu.memory_space<vmem>>, vector<8x128xf32>
      %20 = arith.addf %19, %18 : vector<8x128xf32>
      %c0_16 = arith.constant 0 : index
      %c0_17 = arith.constant 0 : index
      %21 = vector.load %arg8[%c0_16, %c0_17] : memref<8x128xf32, #tpu.memory_space<vmem>>, vector<8x128xf32>
      tpu.vector_store %arg8[%c0_16, %c0_17], %20 {strides = array<i32>} : memref<8x128xf32, #tpu.memory_space<vmem>>, vector<8x128xf32>,
    } else {
    }
    return
  }
  func.func @transform_0(%arg0: i32, %arg1: i32, %arg2: i32) -> (i32, i32) {
    %c0_i32 = arith.constant 0 : i32
    return %arg0, %arg2 : i32, i32
  }
  func.func @transform_1(%arg0: i32, %arg1: i32, %arg2: i32) -> (i32, i32) {
    %c0_i32 = arith.constant 0 : i32
    return %arg2, %arg1 : i32, i32
  }
  func.func @transform_2(%arg0: i32, %arg1: i32, %arg2: i32) -> (i32, i32) {
    %c0_i32 = arith.constant 0 : i32
    %c0_i32_0 = arith.constant 0 : i32
    return %c0_i32, %arg1 : i32, i32
  }
  func.func @transform_3(%arg0: i32, %arg1: i32, %arg2: i32) -> (i32, i32) {
    %c0_i32 = arith.constant 0 : i32
    %c0_i32_0 = arith.constant 0 : i32
    %c0_i32_1 = arith.constant 0 : i32
    return %c0_i32, %c0_i32_0 : i32, i32
  }
  func.func @transform_4(%arg0: i32, %arg1: i32, %arg2: i32) -> (i32, i32) {
    %c0_i32 = arith.constant 0 : i32
    %c0_i32_0 = arith.constant 0 : i32
    return %c0_i32, %arg1 : i32, i32
  }
  func.func @transform_5(%arg0: i32, %arg1: i32, %arg2: i32) -> (i32, i32) {
    %c0_i32 = arith.constant 0 : i32
    return %arg0, %arg1 : i32, i32
  }
}

</mosaic_0001>

<llo_original>
// kernel: tpu_custom_call.1
$region0: #{tpu_custom_call.1}
  #allocation0 [shape = 'u32[]', space=smem, size = 0x4, offset = 0x4, fixed_abs, tag = 'smem constant byte address 0x4 - core index']
  #allocation1 [shape = 'u32[144,128]{1,0:T(1,128)}', space=vmem, size = 0x12000, scoped, tag = 'internal scratch']
  #allocation2 [shape = 'f32[8,128]{1,0:T(8,128)}', space=vmem, size = 0x1000, scoped, tag = 'scratch operand']
  #allocation3 [shape = 'f32[8,128]{1,0:T(8,128)}', space=vmem, size = 0x1000, scoped, tag = 'scratch operand']
  %s0 = inlined_call_operand.hbm [shape: bf16[24,256], index: 0, kind: input, shape index: {}]
  %s1 = inlined_call_operand.hbm [shape: bf16[256,256], index: 1, kind: input, shape index: {}]
  %s2 = inlined_call_operand.vmem [shape: f32[1,256], index: 2, kind: input, shape index: {}]
  %s3 = inlined_call_operand.hbm [shape: bf16[256,128], index: 3, kind: input, shape index: {}]
  %s4 = inlined_call_operand.hbm [shape: bf16[128,256], index: 4, kind: input, shape index: {}]
  %s5 = inlined_call_operand.hbm [shape: f32[24,256], index: 5, kind: output, shape index: {}]
  %s6 = sld [smem:[#allocation0]]
  $region93: #{tpu_custom_call.1} parent=0
    _
  %s8 = ssub.s32 1, %s6
  %s9 = scalar_select 0, %s8, %s6
  $region1: #{tpu_custom_call.1} parent=0
    #allocation4 [shape = 'u8[4096]{0}', space=vmem, size = 0x1000, scoped, tag = 'input window, operand 0']
    #allocation5 [shape = 's32[2]{0}', space=sflag, size = 0x8, scoped, tag = 'scoped memory for tpu_custom_call.1']
    #allocation6 [shape = 's32[2]{0}', space=sflag, size = 0x8, scoped, tag = 'scoped memory for tpu_custom_call.1']
    #allocation7 [shape = 'u8[65536]{0}', space=vmem, size = 0x10000, scoped, tag = 'input window, operand 1']
    #allocation8 [shape = 's32[2]{0}', space=sflag, size = 0x8, scoped, tag = 'scoped memory for tpu_custom_call.1']
    #allocation9 [shape = 'u8[65536]{0}', space=vmem, size = 0x10000, scoped, tag = 'input window, operand 3, single buffered']
    #allocation10 [shape = 'u8[65536]{0}', space=vmem, size = 0x10000, scoped, tag = 'input window, operand 4']
    #allocation11 [shape = 's32[2]{0}', space=sflag, size = 0x8, scoped, tag = 'scoped memory for tpu_custom_call.1']
    #allocation12 [shape = 'u8[8192]{0}', space=vmem, size = 0x2000, scoped, tag = 'output window, operand 0']
    %10 = vsyncpa [#allocation5], 0
    %s11 = scalar_lea.sflag [#allocation5], 1
    %12 = vsyncpa %s11, 0
    %13 = vsyncpa [#allocation8], 0
    %s14 = scalar_lea.sflag [#allocation8], 1
    %15 = vsyncpa %s14, 0
    %16 = vsyncpa [#allocation11], 0
    %s17 = scalar_lea.sflag [#allocation11], 1
    %18 = vsyncpa %s17, 0
    %19 = vsyncpa [#allocation6], 0
    %s20 = scalar_lea.sflag [#allocation6], 1
    %21 = vsyncpa %s20, 0
    loop: start=0, step=1, limit=14
    $region2: #{tpu_custom_call.1} parent=1 // loop_pre_header
      _
    $region3: #{tpu_custom_call.1} parent=1 // loop_header
      %s23 = sphi 0, %s27
      %p24 = scmp.ge.s32.totalorder %s23, 14
      %s30 = sphi 0, %s49
      %s31 = sphi 0, %s45
      %s32 = sphi 0, %s41
      %s33 = sphi 0, %s30
      %s34 = sphi 0, %s31
      %s35 = sphi 0, %s32
      %s36 = sphi 0, %s33
      %s37 = sphi 0, %s34
      %s38 = sphi 0, %s35
      %s54 = sphi 0, %s56
      %s57 = sphi 0, %s54
      %s58 = sphi 0, %s57
      %s74 = sphi 0, %s58
      %s82 = sphi 0, %s84
      %s85 = sphi 0, %s82
      %s86 = sphi 0, %s85
      %s102 = sphi 0, %s86
      %s108 = sphi 0, %s110
      %s111 = sphi 0, %s108
      %s112 = sphi 0, %s111
      %s128 = sphi 0, %s112
      %s132 = sphi 0, %s132
      %s134 = sphi 0, %s132
      %s135 = sphi 0, %s134
      %s149 = sphi 0, %s135
      %s155 = sphi 0, %s157
      %s158 = sphi 0, %s155
      %s159 = sphi 0, %s158
      %s175 = sphi 0, %s159
      %s183 = sphi 0, %s185
      %s186 = sphi 0, %s183
      %s187 = sphi 0, %s186
      %s203 = sphi 0, %s187
    $region4: #{tpu_custom_call.1} parent=1 // loop_header_branch
      %26 = sbr.rel (%p24) target = $region8
    $region5: #{tpu_custom_call.1} parent=1 // loop_body
      %s28 = ssub.s32 %s23, 1
      %s29 = ssub.s32 %s23, 2
      %s39 = sadd.s32 1, %s32
      %p40 = scmp.ge.s32.totalorder %s39, 2
      %s41 = scalar_select %p40, 0, %s39
      %s42 = sadd.s32 1, %s31
      %s43 = scalar_select %p40, %s42, %s31
      %p44 = scmp.ge.s32.totalorder %s43, 2
      %s45 = scalar_select %p44, 0, %s43
      %s46 = sadd.s32 1, %s30
      %s47 = scalar_select %p44, %s46, %s30
      %p48 = scmp.ge.s32.totalorder %s47, 3
      %s49 = scalar_select %p48, 0, %s47
      %s50 = ssub.s32 %s30, %s49
      %s51 = ssub.s32 %s32, %s41
      %s52 = sor.u32 %s50, %s51
      %p53 = scmp.eq.s32.totalorder %s52, 0
      %s55 = sadd.s32 %s54, 1
      %s56 = scalar_select %p53, %s54, %s55
      %p59 = pneg %p53
      %p60 = scmp.eq.s32.totalorder %s23, 11
      %p61 = por %p59, %p60
      %p62 = scmp.ne.s32.totalorder %s54, %s57
      %p63 = scmp.eq.s32.totalorder %s23, 0
      %p64 = por %p62, %p63
      %p65 = scmp.ne.s32.totalorder %s54, %s57
      %p66 = scmp.eq.s32.totalorder %s28, 11
      %p67 = por %p65, %p66
      %p68 = scmp.ne.s32.totalorder %s57, %s58
      %p69 = scmp.eq.s32.totalorder %s28, 0
      %p70 = por %p68, %p69
      %p71 = scmp.ne.s32.totalorder %s57, %s58
      %p72 = scmp.eq.s32.totalorder %s29, 11
      %p73 = por %p71, %p72
      %p75 = scmp.ne.s32.totalorder %s58, %s74
      %p76 = scmp.eq.s32.totalorder %s29, 0
      %p77 = por %p75, %p76
      %s78 = ssub.s32 %s32, %s41
      %s79 = ssub.s32 %s31, %s45
      %s80 = sor.u32 %s78, %s79
      %p81 = scmp.eq.s32.totalorder %s80, 0
      %s83 = sadd.s32 %s82, 1
      %s84 = scalar_select %p81, %s82, %s83
      %p87 = pneg %p81
      %p88 = scmp.eq.s32.totalorder %s23, 11
      %p89 = por %p87, %p88
      %p90 = scmp.ne.s32.totalorder %s82, %s85
      %p91 = scmp.eq.s32.totalorder %s23, 0
      %p92 = por %p90, %p91
      %p93 = scmp.ne.s32.totalorder %s82, %s85
      %p94 = scmp.eq.s32.totalorder %s28, 11
      %p95 = por %p93, %p94
      %p96 = scmp.ne.s32.totalorder %s85, %s86
      %p97 = scmp.eq.s32.totalorder %s28, 0
      %p98 = por %p96, %p97
      %p99 = scmp.ne.s32.totalorder %s85, %s86
      %p100 = scmp.eq.s32.totalorder %s29, 11
      %p101 = por %p99, %p100
      %p103 = scmp.ne.s32.totalorder %s86, %s102
      %p104 = scmp.eq.s32.totalorder %s29, 0
      %p105 = por %p103, %p104
      %s106 = ssub.s32 %s31, %s45
      %p107 = scmp.eq.s32.totalorder %s106, 0
      %s109 = sadd.s32 %s108, 1
      %s110 = scalar_select %p107, %s108, %s109
      %p113 = pneg %p107
      %p114 = scmp.eq.s32.totalorder %s23, 11
      %p115 = por %p113, %p114
      %p116 = scmp.ne.s32.totalorder %s108, %s111
      %p117 = scmp.eq.s32.totalorder %s23, 0
      %p118 = por %p116, %p117
      %p119 = scmp.ne.s32.totalorder %s108, %s111
      %p120 = scmp.eq.s32.totalorder %s28, 11
      %p121 = por %p119, %p120
      %p122 = scmp.ne.s32.totalorder %s111, %s112
      %p123 = scmp.eq.s32.totalorder %s28, 0
      %p124 = por %p122, %p123
      %p125 = scmp.ne.s32.totalorder %s111, %s112
      %p126 = scmp.eq.s32.totalorder %s29, 11
      %p127 = por %p125, %p126
      %p129 = scmp.ne.s32.totalorder %s112, %s128
      %p130 = scmp.eq.s32.totalorder %s29, 0
      %p131 = por %p129, %p130
      %s133 = sadd.s32 %s132, 1
      %p136 = scmp.eq.s32.totalorder %s23, 11
      %p137 = scmp.ne.s32.totalorder %s132, %s134
      %p138 = scmp.eq.s32.totalorder %s23, 0
      %p139 = por %p137, %p138
      %p140 = scmp.ne.s32.totalorder %s132, %s134
      %p141 = scmp.eq.s32.totalorder %s28, 11
      %p142 = por %p140, %p141
      %p143 = scmp.ne.s32.totalorder %s134, %s135
      %p144 = scmp.eq.s32.totalorder %s28, 0
      %p145 = por %p143, %p144
      %p146 = scmp.ne.s32.totalorder %s134, %s135
      %p147 = scmp.eq.s32.totalorder %s29, 11
      %p148 = por %p146, %p147
      %p150 = scmp.ne.s32.totalorder %s135, %s149
      %p151 = scmp.eq.s32.totalorder %s29, 0
      %p152 = por %p150, %p151
      %s153 = ssub.s32 %s31, %s45
      %p154 = scmp.eq.s32.totalorder %s153, 0
      %s156 = sadd.s32 %s155, 1
      %s157 = scalar_select %p154, %s155, %s156
      %p160 = pneg %p154
      %p161 = scmp.eq.s32.totalorder %s23, 11
      %p162 = por %p160, %p161
      %p163 = scmp.ne.s32.totalorder %s155, %s158
      %p164 = scmp.eq.s32.totalorder %s23, 0
      %p165 = por %p163, %p164
      %p166 = scmp.ne.s32.totalorder %s155, %s158
      %p167 = scmp.eq.s32.totalorder %s28, 11
      %p168 = por %p166, %p167
      %p169 = scmp.ne.s32.totalorder %s158, %s159
      %p170 = scmp.eq.s32.totalorder %s28, 0
      %p171 = por %p169, %p170
      %p172 = scmp.ne.s32.totalorder %s158, %s159
      %p173 = scmp.eq.s32.totalorder %s29, 11
      %p174 = por %p172, %p173
      %p176 = scmp.ne.s32.totalorder %s159, %s175
      %p177 = scmp.eq.s32.totalorder %s29, 0
      %p178 = por %p176, %p177
      %s179 = ssub.s32 %s30, %s49
      %s180 = ssub.s32 %s31, %s45
      %s181 = sor.u32 %s179, %s180
      %p182 = scmp.eq.s32.totalorder %s181, 0
      %s184 = sadd.s32 %s183, 1
      %s185 = scalar_select %p182, %s183, %s184
      %p188 = pneg %p182
      %p189 = scmp.eq.s32.totalorder %s23, 11
      %p190 = por %p188, %p189
      %p191 = scmp.ne.s32.totalorder %s183, %s186
      %p192 = scmp.eq.s32.totalorder %s23, 0
      %p193 = por %p191, %p192
      %p194 = scmp.ne.s32.totalorder %s183, %s186
      %p195 = scmp.eq.s32.totalorder %s28, 11
      %p196 = por %p194, %p195
      %p197 = scmp.ne.s32.totalorder %s186, %s187
      %p198 = scmp.eq.s32.totalorder %s28, 0
      %p199 = por %p197, %p198
      %p200 = scmp.ne.s32.totalorder %s186, %s187
      %p201 = scmp.eq.s32.totalorder %s29, 11
      %p202 = por %p200, %p201
      %p204 = scmp.ne.s32.totalorder %s187, %s203
      %p205 = scmp.eq.s32.totalorder %s29, 0
      %p206 = por %p204, %p205
      %p207 = scmp.le.s32.totalorder 1, %s23
      %p208 = scmp.lt.s32.totalorder %s23, 13
      %p209 = pnand %p207, %p208
      %p210 = pneg %p209
      // Predicated region
      $region9: #{tpu_custom_call.1} parent=5 // pred_check
        _
      $region10: #{tpu_custom_call.1} parent=5 // pred_check_branch
        %212 = sbr.rel (%p209) target = $region12
      $region11: #{tpu_custom_call.1} parent=5 // pred_region
        %s213 = ssub.s32 %s23, 1
        // Predicated region
        $region13: #{tpu_custom_call.1} parent=11 // pred_check
          %p214 = pneg %p145
        $region14: #{tpu_custom_call.1} parent=11 // pred_check_branch
          %216 = sbr.rel (%p214) target = $region16
        $region15: #{tpu_custom_call.1} parent=11 // pred_region
          %s218 = ssub.s32 2048, 2048
          %219 = vsyncadd [#allocation8], %s218
          %s220 = sshll.u32 [#allocation9], 4
          %s221 = int_to_ptr.vmem [resolvable:$true] %s220
          %226 = dma.hbm_to_vmem [thread:$0]  %s3, 2048, %s221, [#allocation8], 64, 64, 4
        $region16: #{tpu_custom_call.1} parent=11 // pred_fallthru
          _
      $region12: #{tpu_custom_call.1} parent=5 // pred_fallthru
        _
      %p227 = scmp.lt.s32.totalorder %s23, 12
      // Predicated region
      $region17: #{tpu_custom_call.1} parent=5 // pred_check
        %p228 = pneg %p227
      $region18: #{tpu_custom_call.1} parent=5 // pred_check_branch
        %230 = sbr.rel (%p228) target = $region20
      $region19: #{tpu_custom_call.1} parent=5 // pred_region
        // Predicated region
        $region21: #{tpu_custom_call.1} parent=19 // pred_check
          %p231 = pneg %p64
        $region22: #{tpu_custom_call.1} parent=19 // pred_check_branch
          %233 = sbr.rel (%p231) target = $region24
        $region23: #{tpu_custom_call.1} parent=19 // pred_region
          %s234 = sand.u32 %s54, 1
          %s235 = scalar_lea.sflag [#allocation5], %s234
          %s236 = sand.u32 %s54, 1
          %s237 = smul.addr %s236, 4
          %s238 = scalar_lea.vmem [#allocation4], %s237
          %s240 = ssub.s32 64, 64
          %241 = vsyncadd %s235, %s240
          %s242 = smul.addr %s30, 2
          %s243 = sadd.s32 %s32, %s242
          %s244 = smul.addr %s243, 64
          %s245 = scalar_lea.hbm %s0, %s244
          %s247 = sshll.u32 %s238, 4
          %s248 = int_to_ptr.vmem [resolvable:$true] %s247
          %250 = dma.hbm_to_vmem [thread:$0]  %s245, 64, %s248, %s235
        $region24: #{tpu_custom_call.1} parent=19 // pred_fallthru
          _
        // Predicated region
        $region25: #{tpu_custom_call.1} parent=19 // pred_check
          %p251 = pneg %p92
        $region26: #{tpu_custom_call.1} parent=19 // pred_check_branch
          %253 = sbr.rel (%p251) target = $region28
        $region27: #{tpu_custom_call.1} parent=19 // pred_region
          %s254 = sand.u32 %s23, 1
          %s255 = scalar_lea.sflag [#allocation8], %s254
          %s256 = sand.u32 %s82, 1
          %s257 = smul.addr %s256, 64
          %s258 = scalar_lea.vmem [#allocation7], %s257
          %s259 = smul.u32 16, %s32
          %s261 = ssub.s32 1024, 1024
          %262 = vsyncadd %s255, %s261
          %s263 = smul.addr %s259, 2
          %s264 = sadd.s32 %s31, %s263
          %s265 = smul.addr %s264, 64
          %s266 = scalar_lea.hbm %s1, %s265
          %s267 = sshll.u32 %s258, 4
          %s268 = int_to_ptr.vmem [resolvable:$true] %s267
          %273 = dma.hbm_to_vmem [thread:$0]  %s266, 1024, %s268, %s255, 128, 64, 4
        $region28: #{tpu_custom_call.1} parent=19 // pred_fallthru
          _
        // Predicated region
        $region29: #{tpu_custom_call.1} parent=19 // pred_check
          %p274 = pneg %p118
        $region30: #{tpu_custom_call.1} parent=19 // pred_check_branch
          %276 = sbr.rel (%p274) target = $region32
        $region31: #{tpu_custom_call.1} parent=19 // pred_region
          %p277 = scmp.lt.s32.totalorder %s31, 1
          %s278 = scalar_select %p277, %s31, 1
          %s279 = scalar_lea.vmem %s2, %s278
        $region32: #{tpu_custom_call.1} parent=19 // pred_fallthru
          _
        // Predicated region
        $region33: #{tpu_custom_call.1} parent=19 // pred_check
          %p280 = pneg %p165
        $region34: #{tpu_custom_call.1} parent=19 // pred_check_branch
          %282 = sbr.rel (%p280) target = $region36
        $region35: #{tpu_custom_call.1} parent=19 // pred_region
          %s283 = sand.u32 %s155, 1
          %s284 = scalar_lea.sflag [#allocation11], %s283
          %s285 = sand.u32 %s155, 1
          %s286 = smul.addr %s285, 64
          %s287 = scalar_lea.vmem [#allocation10], %s286
          %s289 = ssub.s32 1024, 1024
          %290 = vsyncadd %s284, %s289
          %s291 = smul.addr %s31, 64
          %s292 = scalar_lea.hbm %s4, %s291
          %s293 = sshll.u32 %s287, 4
          %s294 = int_to_ptr.vmem [resolvable:$true] %s293
          %299 = dma.hbm_to_vmem [thread:$0]  %s292, 1024, %s294, %s284, 128, 64, 4
        $region36: #{tpu_custom_call.1} parent=19 // pred_fallthru
          _
      $region20: #{tpu_custom_call.1} parent=5 // pred_fallthru
        _
      %p300 = scmp.le.s32.totalorder 1, %s23
      %p301 = scmp.lt.s32.totalorder %s23, 13
      %p302 = pnand %p300, %p301
      %p303 = pneg %p302
      // Predicated region
      $region37: #{tpu_custom_call.1} parent=5 // pred_check
        _
      $region38: #{tpu_custom_call.1} parent=5 // pred_check_branch
        %305 = sbr.rel (%p302) target = $region40
      $region39: #{tpu_custom_call.1} parent=5 // pred_region
        %s306 = ssub.s32 %s23, 1
        %s307 = sand.u32 %s57, 1
        %s308 = scalar_lea.sflag [#allocation5], %s307
        %s309 = sand.u32 %s57, 1
        %s310 = smul.addr %s309, 4
        %s311 = scalar_lea.vmem [#allocation4], %s310
        // Predicated region
        $region41: #{tpu_custom_call.1} parent=39 // pred_check
          %p312 = pneg %p70
        $region42: #{tpu_custom_call.1} parent=39 // pred_check_branch
          %314 = sbr.rel (%p312) target = $region44
        $region43: #{tpu_custom_call.1} parent=39 // pred_region
          %315 = dma.done %s308, 64
        $region44: #{tpu_custom_call.1} parent=39 // pred_fallthru
          _
        %s316 = sand.u32 %s28, 1
        %s317 = scalar_lea.sflag [#allocation8], %s316
        %s318 = sand.u32 %s85, 1
        %s319 = smul.addr %s318, 64
        %s320 = scalar_lea.vmem [#allocation7], %s319
        // Predicated region
        $region45: #{tpu_custom_call.1} parent=39 // pred_check
          %p321 = pneg %p98
        $region46: #{tpu_custom_call.1} parent=39 // pred_check_branch
          %323 = sbr.rel (%p321) target = $region48
        $region47: #{tpu_custom_call.1} parent=39 // pred_region
          %324 = dma.done %s317, 1024
        $region48: #{tpu_custom_call.1} parent=39 // pred_fallthru
          _
        // Predicated region
        $region49: #{tpu_custom_call.1} parent=39 // pred_check
          %p325 = pneg %p145
        $region50: #{tpu_custom_call.1} parent=39 // pred_check_branch
          %327 = sbr.rel (%p325) target = $region52
        $region51: #{tpu_custom_call.1} parent=39 // pred_region
          %328 = dma.done [#allocation8], 2048
        $region52: #{tpu_custom_call.1} parent=39 // pred_fallthru
          _
        %s329 = sand.u32 %s158, 1
        %s330 = scalar_lea.sflag [#allocation11], %s329
        %s331 = sand.u32 %s158, 1
        %s332 = smul.addr %s331, 64
        %s333 = scalar_lea.vmem [#allocation10], %s332
        // Predicated region
        $region53: #{tpu_custom_call.1} parent=39 // pred_check
          %p334 = pneg %p171
        $region54: #{tpu_custom_call.1} parent=39 // pred_check_branch
          %336 = sbr.rel (%p334) target = $region56
        $region55: #{tpu_custom_call.1} parent=39 // pred_region
          %337 = dma.done %s330, 1024
        $region56: #{tpu_custom_call.1} parent=39 // pred_fallthru
          _
        %s338 = sand.u32 %s57, 1
        %s339 = scalar_lea.sflag [#allocation5], %s338
        %s340 = sand.u32 %s57, 1
        %s341 = smul.addr %s340, 4
        %s342 = scalar_lea.vmem [#allocation4], %s341
        %p343 = pneg %p70
        %p344 = pneg %p67
        %s345 = sand.u32 %s28, 1
        %s346 = scalar_lea.sflag [#allocation8], %s345
        %s347 = sand.u32 %s85, 1
        %s348 = smul.addr %s347, 64
        %s349 = scalar_lea.vmem [#allocation7], %s348
        %p350 = pneg %p98
        %p351 = pneg %p95
        %p352 = scmp.lt.s32.totalorder %s34, 1
        %s353 = scalar_select %p352, %s34, 1
        %s354 = scalar_lea.vmem %s2, %s353
        %p355 = pneg %p124
        %p356 = pneg %p121
        %p357 = pneg %p145
        %p358 = pneg %p142
        %s359 = sand.u32 %s158, 1
        %s360 = scalar_lea.sflag [#allocation11], %s359
        %s361 = sand.u32 %s158, 1
        %s362 = smul.addr %s361, 64
        %s363 = scalar_lea.vmem [#allocation10], %s362
        %p364 = pneg %p171
        %p365 = pneg %p168
        %p366 = pneg %p199
        %p367 = pneg %p196
        %s368 = sand.u32 %s186, 1
        %s369 = scalar_lea.sflag [#allocation6], %s368
        %s370 = sand.u32 %s186, 1
        %s371 = smul.addr %s370, 8
        %s372 = scalar_lea.vmem [#allocation12], %s371
        %s373 = smul.u32 16, %s35
        %p374 = scmp.lt.s32.totalorder %s34, 1
        %s375 = scalar_select %p374, %s34, 1
        %s376 = scalar_lea.vmem %s2, %s375
        %v378 = vld [vmem:[%s311] sm:$0xf]
        %v379 = vld [vmem:[%s320] sm:$0xf]
        %v380 = vld [vmem:[%s320 + $0x4] sm:$0xf]
        %v381 = vld [vmem:[%s320 + $0x8] sm:$0xf]
        %v382 = vld [vmem:[%s320 + $0xc] sm:$0xf]
        %v383 = vld [vmem:[%s320 + $0x10] sm:$0xf]
        %v384 = vld [vmem:[%s320 + $0x14] sm:$0xf]
        %v385 = vld [vmem:[%s320 + $0x18] sm:$0xf]
        %v386 = vld [vmem:[%s320 + $0x1c] sm:$0xf]
        %v387 = vld [vmem:[%s320 + $0x20] sm:$0xf]
        %v388 = vld [vmem:[%s320 + $0x24] sm:$0xf]
        %v389 = vld [vmem:[%s320 + $0x28] sm:$0xf]
        %v390 = vld [vmem:[%s320 + $0x2c] sm:$0xf]
        %v391 = vld [vmem:[%s320 + $0x30] sm:$0xf]
        %v392 = vld [vmem:[%s320 + $0x34] sm:$0xf]
        %v393 = vld [vmem:[%s320 + $0x38] sm:$0xf]
        %v394 = vld [vmem:[%s320 + $0x3c] sm:$0xf]
        %v411 = vunpack.c.l.b16 %v379
        %v412 = vunpack.c.l.b16 %v380
        %v413 = vunpack.c.l.b16 %v381
        %v414 = vunpack.c.l.b16 %v382
        %v415 = vunpack.c.l.b16 %v383
        %v416 = vunpack.c.l.b16 %v384
        %v417 = vunpack.c.l.b16 %v385
        %v418 = vunpack.c.l.b16 %v386
        %v419 = vunpack.c.l.b16 %v387
        %v420 = vunpack.c.l.b16 %v388
        %v421 = vunpack.c.l.b16 %v389
        %v422 = vunpack.c.l.b16 %v390
        %v423 = vunpack.c.l.b16 %v391
        %v424 = vunpack.c.l.b16 %v392
        %v425 = vunpack.c.l.b16 %v393
        %v426 = vunpack.c.l.b16 %v394
        %v427 = vpack.c.b16 %v412, %v411
        %v428 = vpack.c.b16 %v414, %v413
        %v429 = vpack.c.b16 %v416, %v415
        %v430 = vpack.c.b16 %v418, %v417
        %v431 = vpack.c.b16 %v420, %v419
        %v432 = vpack.c.b16 %v422, %v421
        %v433 = vpack.c.b16 %v424, %v423
        %v434 = vpack.c.b16 %v426, %v425
        %443 = vmatprep.subr.bf16.mxu0 0
        %444 = vmatpush1.bf16.msra.mxu0 %v427
        %445 = vmatprep.subr.bf16.mxu0 0
        %446 = vmatpush1.bf16.msra.mxu0 %v428
        %447 = vmatprep.subr.bf16.mxu0 0
        %448 = vmatpush1.bf16.msra.mxu0 %v429
        %449 = vmatprep.subr.bf16.mxu0 0
        %450 = vmatpush1.bf16.msra.mxu0 %v430
        %451 = vmatprep.subr.bf16.mxu0 0
        %452 = vmatpush1.bf16.msra.mxu0 %v431
        %453 = vmatprep.subr.bf16.mxu0 0
        %454 = vmatpush1.bf16.msra.mxu0 %v432
        %455 = vmatprep.subr.bf16.mxu0 0
        %456 = vmatpush1.bf16.msra.mxu0 %v433
        %457 = vmatprep.subr.bf16.mxu0 0
        %458 = vmatpush1.bf16.msra.mxu0 %v434
        %459 = vmatprep.subr.bf16.mxu0 0
        %460 = vmatpush1.bf16.msra.mxu0 0
        %461 = vmatprep.subr.bf16.mxu0 0
        %462 = vmatpush1.bf16.msra.mxu0 0
        %463 = vmatprep.subr.bf16.mxu0 0
        %464 = vmatpush1.bf16.msra.mxu0 0
        %465 = vmatprep.subr.bf16.mxu0 0
        %466 = vmatpush1.bf16.msra.mxu0 0
        %467 = vmatprep.subr.bf16.mxu0 0
        %468 = vmatpush1.bf16.msra.mxu0 0
        %469 = vmatprep.subr.bf16.mxu0 0
        %470 = vmatpush1.bf16.msra.mxu0 0
        %471 = vmatprep.subr.bf16.mxu0 0
        %472 = vmatpush1.bf16.msra.mxu0 0
        %473 = vmatprep.subr.bf16.mxu0 0
        %474 = vmatpush1.bf16.msra.mxu0 0
        %475 = vmatprep.mubr.bf16.mxu0 0
        %476 = vmatmul.mubr.bf16.gmra.mrb[0].mxu0 %v378
        %v477 = vpop.f32.mrb[0].mxu0
        %v478 = vadd.f32 0.0, %v477
        %v479 = vpop.f32.mrb[0].mxu0
        %v480 = vpop.f32.mrb[0].mxu0
        %v481 = vpop.f32.mrb[0].mxu0
        %482 = vdwg.mxu0
        %p483 = scmp.eq.s32.totalorder %s35, 0
        // Predicated region
        $region57: #{tpu_custom_call.1} parent=39 // pred_check
          %p484 = pneg %p483
        $region58: #{tpu_custom_call.1} parent=39 // pred_check_branch
          %486 = sbr.rel (%p484) target = $region60
        $region59: #{tpu_custom_call.1} parent=39 // pred_region
          %v487 = vld [vmem:[%s376] sm:$0x1]
          %v489 = vlaneseq
          %v490 = vshrl.u32 %v489, 7
          %v491 = vsub.s32 0, %v490
          %v492 = vrot.slane %v487, %v491
          %v494 = vadd.f32 %v478, %v492
          %495 = vst [vmem:[#allocation2] sm:$0xff] %v494
        $region60: #{tpu_custom_call.1} parent=39 // pred_fallthru
          _
        %p496 = scmp.ne.s32.totalorder %s35, 0
        // Predicated region
        $region61: #{tpu_custom_call.1} parent=39 // pred_check
          %p497 = pneg %p496
        $region62: #{tpu_custom_call.1} parent=39 // pred_check_branch
          %499 = sbr.rel (%p497) target = $region64
        $region63: #{tpu_custom_call.1} parent=39 // pred_region
          %v500 = vld [vmem:[#allocation2] sm:$0xff]
          %v501 = vadd.f32 %v500, %v478
          %502 = vst [vmem:[#allocation2] sm:$0xff] %v501
        $region64: #{tpu_custom_call.1} parent=39 // pred_fallthru
          _
        %p503 = scmp.eq.s32.totalorder %s34, 0
        // Predicated region
        $region65: #{tpu_custom_call.1} parent=39 // pred_check
          %p504 = pneg %p503
        $region66: #{tpu_custom_call.1} parent=39 // pred_check_branch
          %506 = sbr.rel (%p504) target = $region68
        $region67: #{tpu_custom_call.1} parent=39 // pred_region
          %s507 = smul.u32 %s35, 128
          %s508 = sshra.s32 %s507, 3
          %s509 = sand.u32 %s507, 7
          %s510 = smul.addr %s508, 4
          %s511 = scalar_lea.vmem [#allocation9], %s510
          %v512 = vld [vmem:[%s511] sm:$0xf]
          %v513 = vld [vmem:[%s511 + $0x4] sm:$0xf]
          %v514 = vld [vmem:[%s511 + $0x8] sm:$0xf]
          %v515 = vld [vmem:[%s511 + $0xc] sm:$0xf]
          %v516 = vld [vmem:[%s511 + $0x10] sm:$0xf]
          %v517 = vld [vmem:[%s511 + $0x14] sm:$0xf]
          %v518 = vld [vmem:[%s511 + $0x18] sm:$0xf]
          %v519 = vld [vmem:[%s511 + $0x1c] sm:$0xf]
          %v520 = vld [vmem:[%s511 + $0x20] sm:$0xf]
          %v521 = vld [vmem:[%s511 + $0x24] sm:$0xf]
          %v522 = vld [vmem:[%s511 + $0x28] sm:$0xf]
          %v523 = vld [vmem:[%s511 + $0x2c] sm:$0xf]
          %v524 = vld [vmem:[%s511 + $0x30] sm:$0xf]
          %v525 = vld [vmem:[%s511 + $0x34] sm:$0xf]
          %v526 = vld [vmem:[%s511 + $0x38] sm:$0xf]
          %v527 = vld [vmem:[%s511 + $0x3c] sm:$0xf]
          %v544 = vunpack.c.l.b16 %v512
          %v545 = vunpack.c.l.b16 %v513
          %v546 = vunpack.c.l.b16 %v514
          %v547 = vunpack.c.l.b16 %v515
          %v548 = vunpack.c.l.b16 %v516
          %v549 = vunpack.c.l.b16 %v517
          %v550 = vunpack.c.l.b16 %v518
          %v551 = vunpack.c.l.b16 %v519
          %v552 = vunpack.c.l.b16 %v520
          %v553 = vunpack.c.l.b16 %v521
          %v554 = vunpack.c.l.b16 %v522
          %v555 = vunpack.c.l.b16 %v523
          %v556 = vunpack.c.l.b16 %v524
          %v557 = vunpack.c.l.b16 %v525
          %v558 = vunpack.c.l.b16 %v526
          %v559 = vunpack.c.l.b16 %v527
          %v560 = vpack.c.b16 %v545, %v544
          %v561 = vpack.c.b16 %v547, %v546
          %v562 = vpack.c.b16 %v549, %v548
          %v563 = vpack.c.b16 %v551, %v550
          %v564 = vpack.c.b16 %v553, %v552
          %v565 = vpack.c.b16 %v555, %v554
          %v566 = vpack.c.b16 %v557, %v556
          %v567 = vpack.c.b16 %v559, %v558
          %576 = vmatprep.subr.bf16.mxu0 0
          %577 = vmatpush1.bf16.msra.mxu0 %v560
          %578 = vmatprep.subr.bf16.mxu0 0
          %579 = vmatpush1.bf16.msra.mxu0 %v561
          %580 = vmatprep.subr.bf16.mxu0 0
          %581 = vmatpush1.bf16.msra.mxu0 %v562
          %582 = vmatprep.subr.bf16.mxu0 0
          %583 = vmatpush1.bf16.msra.mxu0 %v563
          %584 = vmatprep.subr.bf16.mxu0 0
          %585 = vmatpush1.bf16.msra.mxu0 %v564
          %586 = vmatprep.subr.bf16.mxu0 0
          %587 = vmatpush1.bf16.msra.mxu0 %v565
          %588 = vmatprep.subr.bf16.mxu0 0
          %589 = vmatpush1.bf16.msra.mxu0 %v566
          %590 = vmatprep.subr.bf16.mxu0 0
          %591 = vmatpush1.bf16.msra.mxu0 %v567
          %592 = vmatprep.subr.bf16.mxu0 0
          %593 = vmatpush1.bf16.msra.mxu0 0
          %594 = vmatprep.subr.bf16.mxu0 0
          %595 = vmatpush1.bf16.msra.mxu0 0
          %596 = vmatprep.subr.bf16.mxu0 0
          %597 = vmatpush1.bf16.msra.mxu0 0
          %598 = vmatprep.subr.bf16.mxu0 0
          %599 = vmatpush1.bf16.msra.mxu0 0
          %600 = vmatprep.subr.bf16.mxu0 0
          %601 = vmatpush1.bf16.msra.mxu0 0
          %602 = vmatprep.subr.bf16.mxu0 0
          %603 = vmatpush1.bf16.msra.mxu0 0
          %604 = vmatprep.subr.bf16.mxu0 0
          %605 = vmatpush1.bf16.msra.mxu0 0
          %606 = vmatprep.subr.bf16.mxu0 0
          %607 = vmatpush1.bf16.msra.mxu0 0
          %608 = vmatprep.mubr.bf16.mxu0 0
          %609 = vmatmul.mubr.bf16.gmra.mrb[0].mxu0 %v378
          %v610 = vpop.f32.mrb[0].mxu0
          %v611 = vadd.f32 0.0, %v610
          %v612 = vpop.f32.mrb[0].mxu0
          %v613 = vpop.f32.mrb[0].mxu0
          %v614 = vpop.f32.mrb[0].mxu0
          %615 = vdwg.mxu0
          // Predicated region
          $region69: #{tpu_custom_call.1} parent=67 // pred_check
            %p616 = pneg %p483
          $region70: #{tpu_custom_call.1} parent=67 // pred_check_branch
            %618 = sbr.rel (%p616) target = $region72
          $region71: #{tpu_custom_call.1} parent=67 // pred_region
            %619 = vst [vmem:[#allocation3] sm:$0xff] %v611
          $region72: #{tpu_custom_call.1} parent=67 // pred_fallthru
            _
          // Predicated region
          $region73: #{tpu_custom_call.1} parent=67 // pred_check
            %p620 = pneg %p496
          $region74: #{tpu_custom_call.1} parent=67 // pred_check_branch
            %622 = sbr.rel (%p620) target = $region76
          $region75: #{tpu_custom_call.1} parent=67 // pred_region
            %v623 = vld [vmem:[#allocation3] sm:$0xff]
            %v624 = vadd.f32 %v623, %v611
            %625 = vst [vmem:[#allocation3] sm:$0xff] %v624
          $region76: #{tpu_custom_call.1} parent=67 // pred_fallthru
            _
        $region68: #{tpu_custom_call.1} parent=39 // pred_fallthru
          _
        %p626 = scmp.eq.s32.totalorder %s35, 1
        // Predicated region
        $region77: #{tpu_custom_call.1} parent=39 // pred_check
          %p627 = pneg %p626
        $region78: #{tpu_custom_call.1} parent=39 // pred_check_branch
          %629 = sbr.rel (%p627) target = $region80
        $region79: #{tpu_custom_call.1} parent=39 // pred_region
          %v630 = vld [vmem:[#allocation3] sm:$0xff]
          %v631 = vpack.c.bf16 %v630, %v630
          %v632 = vld [vmem:[%s333] sm:$0xf]
          %v633 = vld [vmem:[%s333 + $0x4] sm:$0xf]
          %v634 = vld [vmem:[%s333 + $0x8] sm:$0xf]
          %v635 = vld [vmem:[%s333 + $0xc] sm:$0xf]
          %v636 = vld [vmem:[%s333 + $0x10] sm:$0xf]
          %v637 = vld [vmem:[%s333 + $0x14] sm:$0xf]
          %v638 = vld [vmem:[%s333 + $0x18] sm:$0xf]
          %v639 = vld [vmem:[%s333 + $0x1c] sm:$0xf]
          %v640 = vld [vmem:[%s333 + $0x20] sm:$0xf]
          %v641 = vld [vmem:[%s333 + $0x24] sm:$0xf]
          %v642 = vld [vmem:[%s333 + $0x28] sm:$0xf]
          %v643 = vld [vmem:[%s333 + $0x2c] sm:$0xf]
          %v644 = vld [vmem:[%s333 + $0x30] sm:$0xf]
          %v645 = vld [vmem:[%s333 + $0x34] sm:$0xf]
          %v646 = vld [vmem:[%s333 + $0x38] sm:$0xf]
          %v647 = vld [vmem:[%s333 + $0x3c] sm:$0xf]
          %v664 = vunpack.c.l.b16 %v632
          %v665 = vunpack.c.l.b16 %v633
          %v666 = vunpack.c.l.b16 %v634
          %v667 = vunpack.c.l.b16 %v635
          %v668 = vunpack.c.l.b16 %v636
          %v669 = vunpack.c.l.b16 %v637
          %v670 = vunpack.c.l.b16 %v638
          %v671 = vunpack.c.l.b16 %v639
          %v672 = vunpack.c.l.b16 %v640
          %v673 = vunpack.c.l.b16 %v641
          %v674 = vunpack.c.l.b16 %v642
          %v675 = vunpack.c.l.b16 %v643
          %v676 = vunpack.c.l.b16 %v644
          %v677 = vunpack.c.l.b16 %v645
          %v678 = vunpack.c.l.b16 %v646
          %v679 = vunpack.c.l.b16 %v647
          %v680 = vpack.c.b16 %v665, %v664
          %v681 = vpack.c.b16 %v667, %v666
          %v682 = vpack.c.b16 %v669, %v668
          %v683 = vpack.c.b16 %v671, %v670
          %v684 = vpack.c.b16 %v673, %v672
          %v685 = vpack.c.b16 %v675, %v674
          %v686 = vpack.c.b16 %v677, %v676
          %v687 = vpack.c.b16 %v679, %v678
          %696 = vmatprep.subr.bf16.mxu0 0
          %697 = vmatpush1.bf16.msra.mxu0 %v680
          %698 = vmatprep.subr.bf16.mxu0 0
          %699 = vmatpush1.bf16.msra.mxu0 %v681
          %700 = vmatprep.subr.bf16.mxu0 0
          %701 = vmatpush1.bf16.msra.mxu0 %v682
          %702 = vmatprep.subr.bf16.mxu0 0
          %703 = vmatpush1.bf16.msra.mxu0 %v683
          %704 = vmatprep.subr.bf16.mxu0 0
          %705 = vmatpush1.bf16.msra.mxu0 %v684
          %706 = vmatprep.subr.bf16.mxu0 0
          %707 = vmatpush1.bf16.msra.mxu0 %v685
          %708 = vmatprep.subr.bf16.mxu0 0
          %709 = vmatpush1.bf16.msra.mxu0 %v686
          %710 = vmatprep.subr.bf16.mxu0 0
          %711 = vmatpush1.bf16.msra.mxu0 %v687
          %712 = vmatprep.subr.bf16.mxu0 0
          %713 = vmatpush1.bf16.msra.mxu0 0
          %714 = vmatprep.subr.bf16.mxu0 0
          %715 = vmatpush1.bf16.msra.mxu0 0
          %716 = vmatprep.subr.bf16.mxu0 0
          %717 = vmatpush1.bf16.msra.mxu0 0
          %718 = vmatprep.subr.bf16.mxu0 0
          %719 = vmatpush1.bf16.msra.mxu0 0
          %720 = vmatprep.subr.bf16.mxu0 0
          %721 = vmatpush1.bf16.msra.mxu0 0
          %722 = vmatprep.subr.bf16.mxu0 0
          %723 = vmatpush1.bf16.msra.mxu0 0
          %724 = vmatprep.subr.bf16.mxu0 0
          %725 = vmatpush1.bf16.msra.mxu0 0
          %726 = vmatprep.subr.bf16.mxu0 0
          %727 = vmatpush1.bf16.msra.mxu0 0
          %728 = vmatprep.mubr.bf16.mxu0 0
          %729 = vmatmul.mubr.bf16.gmra.mrb[0].mxu0 %v631
          %v730 = vpop.f32.mrb[0].mxu0
          %v731 = vadd.f32 0.0, %v730
          %v732 = vpop.f32.mrb[0].mxu0
          %v733 = vpop.f32.mrb[0].mxu0
          %v734 = vpop.f32.mrb[0].mxu0
          %735 = vdwg.mxu0
          %v736 = vld [vmem:[#allocation2] sm:$0xff]
          %v737 = vadd.f32 %v736, %v731
          %738 = vst [vmem:[%s372] sm:$0xff] %v737
        $region80: #{tpu_custom_call.1} parent=39 // pred_fallthru
          _
        %s739 = sand.u32 %s186, 1
        %s740 = scalar_lea.sflag [#allocation6], %s739
        %s741 = sand.u32 %s186, 1
        %s742 = smul.addr %s741, 8
        %s743 = scalar_lea.vmem [#allocation12], %s742
        // Predicated region
        $region81: #{tpu_custom_call.1} parent=39 // pred_check
          %p744 = pneg %p196
        $region82: #{tpu_custom_call.1} parent=39 // pred_check_branch
          %746 = sbr.rel (%p744) target = $region84
        $region83: #{tpu_custom_call.1} parent=39 // pred_region
          %s748 = ssub.s32 128, 128
          %749 = vsyncadd %s740, %s748
          %s750 = smul.addr %s33, 2
          %s751 = sadd.s32 %s34, %s750
          %s752 = smul.addr %s751, 128
          %s753 = scalar_lea.hbm %s5, %s752
          %s755 = sshll.u32 %s743, 4
          %s756 = int_to_ptr.vmem [resolvable:$true] %s755
          %758 = dma.vmem_to_hbm [thread:$0]  %s756, 128, %s753, %s740
        $region84: #{tpu_custom_call.1} parent=39 // pred_fallthru
          _
      $region40: #{tpu_custom_call.1} parent=5 // pred_fallthru
        _
      %p759 = scmp.le.s32.totalorder 2, %s23
      // Predicated region
      $region85: #{tpu_custom_call.1} parent=5 // pred_check
        %p760 = pneg %p759
      $region86: #{tpu_custom_call.1} parent=5 // pred_check_branch
        %762 = sbr.rel (%p760) target = $region88
      $region87: #{tpu_custom_call.1} parent=5 // pred_region
        %s763 = ssub.s32 %s23, 2
        // Predicated region
        $region89: #{tpu_custom_call.1} parent=87 // pred_check
          %p764 = pneg %p202
        $region90: #{tpu_custom_call.1} parent=87 // pred_check_branch
          %766 = sbr.rel (%p764) target = $region92
        $region91: #{tpu_custom_call.1} parent=87 // pred_region
          %s767 = sand.u32 %s187, 1
          %s768 = scalar_lea.sflag [#allocation6], %s767
          %s769 = sand.u32 %s187, 1
          %s770 = smul.addr %s769, 8
          %s771 = scalar_lea.vmem [#allocation12], %s770
          %772 = dma.done %s768, 128
        $region92: #{tpu_custom_call.1} parent=87 // pred_fallthru
          _
      $region88: #{tpu_custom_call.1} parent=5 // pred_fallthru
        _
    $region6: #{tpu_custom_call.1} parent=1 // loop_footer
      %s27 = sadd.s32 1, %s23
    $region7: #{tpu_custom_call.1} parent=1 // loop_footer_branch
      %22 = sbr.rel target = $region3
    $region8: #{tpu_custom_call.1} parent=1 // loop_exit
      _
    %773 = vsyncpa [#allocation5], 1
    %s774 = scalar_lea.sflag [#allocation5], 1
    %775 = vsyncpa %s774, 1
    %776 = vsyncpa [#allocation8], 1
    %s777 = scalar_lea.sflag [#allocation8], 1
    %778 = vsyncpa %s777, 1
    %779 = vsyncpa [#allocation11], 1
    %s780 = scalar_lea.sflag [#allocation11], 1
    %781 = vsyncpa %s780, 1
    %782 = vsyncpa [#allocation6], 1
    %s783 = scalar_lea.sflag [#allocation6], 1
    %784 = vsyncpa %s783, 1

</llo_original>
